<compile_context>
chip_gen: v7x
topology: tpu7x:2x2x1
jax: 0.10.0
libtpu: 0.0.40
codegen_flags: <defaults>
</compile_context>

<pallas_src>
import jax
import jax.numpy as jnp
from jax.experimental import pallas as pl
from jax.experimental.pallas import tpu as pltpu

_LANE = 128  # TPU lane width (used only for VMEM footprint accounting).


def _round_up(x, m):
    return ((x + m - 1) // m) * m


def _bottle_net_kernel(x_ref, w_ref, b_ref, o_ref):
    # Hot path: matmul (MXU, f32 accumulate) + bias add + ReLU (VPU).
    x = x_ref[...]                       # (TB, F)        f32 or bf16
    w = w_ref[...]                       # (F, OUT)       same dtype as x
    b = b_ref[...]                       # (1, OUT)       f32
    y = jnp.dot(x, w, preferred_element_type=jnp.float32) + b
    o_ref[...] = jnp.maximum(y, 0.0).astype(o_ref.dtype)


def pack_bottle_net_params(weight, bias, dtype=jnp.float32):
    """One-time packing of PyTorch-layout params.

    weight: (out_dim, F), bias: (out_dim,)
    Returns (w_packed (F, out_dim) in `dtype`, b_packed (1, out_dim) f32).
    Transpose is hoisted out of the per-call hot path; no lane padding.
    """
    w_packed = jnp.asarray(weight, jnp.float32).T.astype(dtype)      # (F, OUT)
    b_packed = jnp.asarray(bias, jnp.float32).reshape(1, -1)         # (1, OUT)
    return w_packed, b_packed


def bottle_net_forward(x, w_packed, b_packed, *, tile_b=16384, min_grid_steps=8):
    """x: (B, F); w_packed (F, OUT), b_packed (1, OUT) from pack_bottle_net_params."""
    B, F = x.shape
    out_dim = w_packed.shape[1]

    # Match the packed-weight dtype (bf16 path halves the dominant x stream).
    x = x.astype(w_packed.dtype)

    # Batch tile: take the whole batch when tiny; otherwise pick TB (multiple
    # of 8) so the grid has >= min_grid_steps steps (keeps both v7x TCs busy
    # and double-buffering active) while capping VMEM via tile_b.
    if B <= 8:
        TB = B
    else:
        TB = min(int(tile_b), _round_up(pl.cdiv(B, min_grid_steps), 8))
        TB = min(TB, _round_up(B, 8))
        TB = max(TB, 8)
    grid = (pl.cdiv(B, TB),)

    # VMEM budget: double-buffered x and out tiles; in VMEM each (TB, <=128)
    # buffer is lane-padded to 128 lanes regardless of logical width.
    x_tile_bytes = TB * _LANE * jnp.dtype(x.dtype).itemsize
    out_tile_bytes = TB * _LANE * 4
    vmem_limit = 2 * (x_tile_bytes + out_tile_bytes) + (4 << 20)   # + headroom
    vmem_limit = int(min(max(vmem_limit, 8 << 20), 48 << 20))

    cost = pl.CostEstimate(
        flops=2 * B * F * out_dim,
        transcendentals=0,
        bytes_accessed=(
            B * F * jnp.dtype(x.dtype).itemsize            # x read
            + F * out_dim * jnp.dtype(w_packed.dtype).itemsize  # weight read
            + out_dim * 4                                   # bias read
            + B * out_dim * 4                               # output write
        ),
    )

    return pl.pallas_call(
        _bottle_net_kernel,
        out_shape=jax.ShapeDtypeStruct((B, out_dim), jnp.float32),
        grid=grid,
        in_specs=[
            pl.BlockSpec((TB, F), lambda i: (i, 0)),          # x: tiled over batch
            pl.BlockSpec((F, out_dim), lambda i: (0, 0)),     # weight: VMEM-resident
            pl.BlockSpec((1, out_dim), lambda i: (0, 0)),     # bias:   VMEM-resident
        ],
        out_specs=pl.BlockSpec((TB, out_dim), lambda i: (i, 0)),
        compiler_params=pltpu.CompilerParams(
            dimension_semantics=("parallel",),   # shards grid steps across TCs on v7x
            vmem_limit_bytes=vmem_limit,
        ),
        cost_estimate=cost,
    )(x, w_packed, b_packed)


if __name__ == "__main__":
    # Small shapes consistent with the module: batch=8, no_input_features=16.
    B, F, OUT = 8, 16, 20

    key = jax.random.PRNGKey(0)
    kx, kw, kb, kx2 = jax.random.split(key, 4)

    # Deterministic PyTorch-style init: uniform(-1/sqrt(F), 1/sqrt(F)).
    bound = 1.0 / (F ** 0.5)
    weight = jax.random.uniform(kw, (OUT, F), jnp.float32, -bound, bound)
    bias = jax.random.uniform(kb, (OUT,), jnp.float32, -bound, bound)
    x = jax.random.normal(kx, (B, F), jnp.float32)

    # One-time parameter packing (transpose hoisted off the hot path).
    w_packed, b_packed = pack_bottle_net_params(weight, bias)  # f32 default

    out = bottle_net_forward(x, w_packed, b_packed)
    out = jax.block_until_ready(out)

    # Reference check in plain JAX.
    ref = jnp.maximum(x @ weight.T + bias, 0.0)
    assert out.shape == (B, OUT)
    assert jnp.allclose(out, ref, atol=1e-5, rtol=1e-5)

    # Secondary sanity check: multi-step grid with a partial last batch tile.
    B2 = 300
    x2 = jax.random.normal(kx2, (B2, F), jnp.float32)
    out2 = jax.block_until_ready(bottle_net_forward(x2, w_packed, b_packed))
    ref2 = jnp.maximum(x2 @ weight.T + bias, 0.0)
    assert out2.shape == (B2, OUT)
    assert jnp.allclose(out2, ref2, atol=1e-5, rtol=1e-5)

    print("KERNEL_OK")
</pallas_src>

<mosaic_0001>
module attributes {stable_mosaic.version = 11 : i64} {
  func.func @_bottle_net_kernel(%arg0: i32, %arg1: memref<8x16xf32, #tpu.memory_space<vmem>>, %arg2: memref<16x20xf32, #tpu.memory_space<vmem>>, %arg3: memref<1x20xf32, #tpu.memory_space<vmem>>, %arg4: memref<8x20xf32, #tpu.memory_space<vmem>>) attributes {dimension_semantics = [#tpu.dimension_semantics<parallel>], iteration_bounds = array<i64: 1>, scalar_prefetch = 0 : i64, scratch_operands = 0 : i64, tpu.core_type = #tpu.core_type<tc>, window_params = [{transform_indices = @transform_0, window_bounds = array<i64: 8, 16>}, {pipeline_mode = #tpu.pipeline_mode<synchronous>, transform_indices = @transform_1, window_bounds = array<i64: 16, 20>}, {pipeline_mode = #tpu.pipeline_mode<synchronous>, transform_indices = @transform_2, window_bounds = array<i64: 1, 20>}, {transform_indices = @transform_3, window_bounds = array<i64: 8, 20>}]} {
    %c0 = arith.constant 0 : index
    %c0_0 = arith.constant 0 : index
    %0 = vector.load %arg1[%c0, %c0_0] : memref<8x16xf32, #tpu.memory_space<vmem>>, vector<8x16xf32>
    %c0_1 = arith.constant 0 : index
    %c0_2 = arith.constant 0 : index
    %1 = vector.load %arg2[%c0_1, %c0_2] : memref<16x20xf32, #tpu.memory_space<vmem>>, vector<16x20xf32>
    %c0_3 = arith.constant 0 : index
    %c0_4 = arith.constant 0 : index
    %2 = vector.load %arg3[%c0_3, %c0_4] : memref<1x20xf32, #tpu.memory_space<vmem>>, vector<1x20xf32>
    %cst = arith.constant dense<0.000000e+00> : vector<8x20xf32>
    %3 = tpu.matmul %0, %1, %cst {dimension_numbers = #tpu.dot_dimension_numbers<[1], [0], [0], [1], [0, 0, 1, 1], [], []>} : vector<8x16xf32>, vector<16x20xf32>, vector<8x20xf32> -> vector<8x20xf32>
    %4 = vector.broadcast %2 : vector<1x20xf32> to vector<8x20xf32>
    %5 = arith.addf %3, %4 : vector<8x20xf32>
    %cst_5 = arith.constant 0.000000e+00 : f32
    %6 = vector.broadcast %cst_5 : f32 to vector<8x20xf32>
    %7 = arith.maximumf %5, %6 : vector<8x20xf32>
    %c0_6 = arith.constant 0 : index
    %c0_7 = arith.constant 0 : index
    %8 = vector.load %arg4[%c0_6, %c0_7] : memref<8x20xf32, #tpu.memory_space<vmem>>, vector<8x20xf32>
    tpu.vector_store %arg4[%c0_6, %c0_7], %7 {strides = array<i32>} : memref<8x20xf32, #tpu.memory_space<vmem>>, vector<8x20xf32>,
    return
  }
  func.func @transform_0(%arg0: i32) -> (i32, i32) {
    %c0_i32 = arith.constant 0 : i32
    %c0_i32_0 = arith.constant 0 : i32
    return %arg0, %c0_i32 : i32, i32
  }
  func.func @transform_1(%arg0: i32) -> (i32, i32) {
    %c0_i32 = arith.constant 0 : i32
    %c0_i32_0 = arith.constant 0 : i32
    %c0_i32_1 = arith.constant 0 : i32
    return %c0_i32, %c0_i32_0 : i32, i32
  }
  func.func @transform_2(%arg0: i32) -> (i32, i32) {
    %c0_i32 = arith.constant 0 : i32
    %c0_i32_0 = arith.constant 0 : i32
    %c0_i32_1 = arith.constant 0 : i32
    return %c0_i32, %c0_i32_0 : i32, i32
  }
  func.func @transform_3(%arg0: i32) -> (i32, i32) {
    %c0_i32 = arith.constant 0 : i32
    %c0_i32_0 = arith.constant 0 : i32
    return %arg0, %c0_i32 : i32, i32
  }
}

</mosaic_0001>

<llo_original>
// kernel: tpu_custom_call.1
$region0: #{tpu_custom_call.1}
  #allocation0 [shape = 'u32[]', space=smem, size = 0x4, offset = 0x4, fixed_abs, tag = 'smem constant byte address 0x4 - core index']
  #allocation1 [shape = 'u32[144,128]{1,0:T(1,128)}', space=vmem, size = 0x12000, scoped, tag = 'internal scratch']
  %s0 = inlined_call_operand.hbm [shape: f32[8,16], index: 0, kind: input, shape index: {}]
  %s1 = inlined_call_operand.hbm [shape: f32[16,20], index: 1, kind: input, shape index: {}]
  %s2 = inlined_call_operand.vmem [shape: f32[1,20], index: 2, kind: input, shape index: {}]
  %s3 = inlined_call_operand.hbm [shape: f32[8,20], index: 3, kind: output, shape index: {}]
  %s4 = sld [smem:[#allocation0]]
  $region30: #{tpu_custom_call.1} parent=0
    _
  %s6 = ssub.s32 1, %s4
  %s7 = scalar_select 0, %s6, %s4
  $region1: #{tpu_custom_call.1} parent=0
    #allocation2 [shape = 'u8[4096]{0}', space=vmem, size = 0x1000, scoped, tag = 'input window, operand 0, single buffered']
    #allocation3 [shape = 's32[1]{0}', space=sflag, size = 0x4, scoped, tag = 'scoped memory for tpu_custom_call.1']
    #allocation4 [shape = 's32[1]{0}', space=sflag, size = 0x4, scoped, tag = 'scoped memory for tpu_custom_call.1']
    #allocation5 [shape = 'u8[8192]{0}', space=vmem, size = 0x2000, scoped, tag = 'input window, operand 1, single buffered']
    #allocation6 [shape = 's32[1]{0}', space=sflag, size = 0x4, scoped, tag = 'scoped memory for tpu_custom_call.1']
    #allocation7 [shape = 'u8[4096]{0}', space=vmem, size = 0x1000, scoped, tag = 'output window, operand 0, single buffered']
    %8 = vsyncpa [#allocation3], 0
    %9 = vsyncpa [#allocation6], 0
    %10 = vsyncpa [#allocation4], 0
    // Predicated region
    $region2: #{tpu_custom_call.1} parent=1 // pred_check
      _
    $region3: #{tpu_custom_call.1} parent=1 // pred_check_branch
      %12 = sbr.rel (0) target = $region5
    $region4: #{tpu_custom_call.1} parent=1 // pred_region
      %s14 = ssub.s32 128, 128
      %15 = vsyncadd [#allocation3], %s14
      %s17 = sshll.u32 [#allocation2], 4
      %s18 = int_to_ptr.vmem [resolvable:$true] %s17
      %20 = dma.hbm_to_vmem [thread:$0]  %s0, 128, %s18, [#allocation3]
    $region5: #{tpu_custom_call.1} parent=1 // pred_fallthru
      _
    // Predicated region
    $region6: #{tpu_custom_call.1} parent=1 // pred_check
      _
    $region7: #{tpu_custom_call.1} parent=1 // pred_check_branch
      %22 = sbr.rel (0) target = $region9
    $region8: #{tpu_custom_call.1} parent=1 // pred_region
      %s24 = ssub.s32 256, 256
      %25 = vsyncadd [#allocation6], %s24
      %s26 = sshll.u32 [#allocation5], 4
      %s27 = int_to_ptr.vmem [resolvable:$true] %s26
      %32 = dma.hbm_to_vmem [thread:$0]  %s1, 256, %s27, [#allocation6], 128, 128, 8
    $region9: #{tpu_custom_call.1} parent=1 // pred_fallthru
      _
    // Predicated region
    $region10: #{tpu_custom_call.1} parent=1 // pred_check
      _
    $region11: #{tpu_custom_call.1} parent=1 // pred_check_branch
      %34 = sbr.rel (0) target = $region13
    $region12: #{tpu_custom_call.1} parent=1 // pred_region
      _
    $region13: #{tpu_custom_call.1} parent=1 // pred_fallthru
      _
    // Predicated region
    $region14: #{tpu_custom_call.1} parent=1 // pred_check
      _
    $region15: #{tpu_custom_call.1} parent=1 // pred_check_branch
      %36 = sbr.rel (0) target = $region17
    $region16: #{tpu_custom_call.1} parent=1 // pred_region
      %37 = dma.done [#allocation3], 128
    $region17: #{tpu_custom_call.1} parent=1 // pred_fallthru
      _
    // Predicated region
    $region18: #{tpu_custom_call.1} parent=1 // pred_check
      _
    $region19: #{tpu_custom_call.1} parent=1 // pred_check_branch
      %39 = sbr.rel (0) target = $region21
    $region20: #{tpu_custom_call.1} parent=1 // pred_region
      %40 = dma.done [#allocation6], 256
    $region21: #{tpu_custom_call.1} parent=1 // pred_fallthru
      _
    %v41 = vld [vmem:[#allocation2] sm:$0xff]
    %v42 = vld [vmem:[#allocation5] sm:$0xff]
    %v43 = vld [vmem:[#allocation5 + $0x8] sm:$0xff]
    %v44 = vld [vmem:[%s2] sm:$0x1]
    %v46 = vlaneseq
    %v47 = vshrl.u32 %v46, 7
    %v48 = vsub.s32 0, %v47
    %v49 = vrot.slane %v44, %v48
    %vm51 = vcmask 130048
    %v53 = vsel %vm51, %v41, 0
    %55 = vmatprep.subr.mxu0 0.0
    %56 = vmatpush1.msra.mxu0 %v42
    %57 = vmatprep.subr.mxu0 0.0
    %58 = vmatpush1.msra.mxu0 %v43
    %59 = vmatprep.subr.mxu0 0.0
    %60 = vmatpush1.msra.mxu0 0.0
    %61 = vmatprep.subr.mxu0 0.0
    %62 = vmatpush1.msra.mxu0 0.0
    %63 = vmatprep.subr.mxu0 0.0
    %64 = vmatpush1.msra.mxu0 0.0
    %65 = vmatprep.subr.mxu0 0.0
    %66 = vmatpush1.msra.mxu0 0.0
    %67 = vmatprep.subr.mxu0 0.0
    %68 = vmatpush1.msra.mxu0 0.0
    %69 = vmatprep.subr.mxu0 0.0
    %70 = vmatpush1.msra.mxu0 0.0
    %71 = vmatprep.subr.mxu0 0.0
    %72 = vmatpush1.msra.mxu0 0.0
    %73 = vmatprep.subr.mxu0 0.0
    %74 = vmatpush1.msra.mxu0 0.0
    %75 = vmatprep.subr.mxu0 0.0
    %76 = vmatpush1.msra.mxu0 0.0
    %77 = vmatprep.subr.mxu0 0.0
    %78 = vmatpush1.msra.mxu0 0.0
    %79 = vmatprep.subr.mxu0 0.0
    %80 = vmatpush1.msra.mxu0 0.0
    %81 = vmatprep.subr.mxu0 0.0
    %82 = vmatpush1.msra.mxu0 0.0
    %83 = vmatprep.subr.mxu0 0.0
    %84 = vmatpush1.msra.mxu0 0.0
    %85 = vmatprep.subr.mxu0 0.0
    %86 = vmatpush1.msra.mxu0 0.0
    %87 = vmatprep.subr.mxu0 0.0
    %88 = vmatpush1.msra.mxu0 0.0
    %89 = vmatprep.subr.mxu0 0.0
    %90 = vmatpush1.msra.mxu0 0.0
    %91 = vmatprep.subr.mxu0 0.0
    %92 = vmatpush1.msra.mxu0 0.0
    %93 = vmatprep.subr.mxu0 0.0
    %94 = vmatpush1.msra.mxu0 0.0
    %95 = vmatprep.subr.mxu0 0.0
    %96 = vmatpush1.msra.mxu0 0.0
    %97 = vmatprep.subr.mxu0 0.0
    %98 = vmatpush1.msra.mxu0 0.0
    %99 = vmatprep.subr.mxu0 0.0
    %100 = vmatpush1.msra.mxu0 0.0
    %101 = vmatprep.subr.mxu0 0.0
    %102 = vmatpush1.msra.mxu0 0.0
    %103 = vmatprep.subr.mxu0 0.0
    %104 = vmatpush1.msra.mxu0 0.0
    %105 = vmatprep.subr.mxu0 0.0
    %106 = vmatpush1.msra.mxu0 0.0
    %107 = vmatprep.subr.mxu0 0.0
    %108 = vmatpush1.msra.mxu0 0.0
    %109 = vmatprep.subr.mxu0 0.0
    %110 = vmatpush1.msra.mxu0 0.0
    %111 = vmatprep.subr.mxu0 0.0
    %112 = vmatpush1.msra.mxu0 0.0
    %113 = vmatprep.subr.mxu0 0.0
    %114 = vmatpush1.msra.mxu0 0.0
    %115 = vmatprep.subr.mxu0 0.0
    %116 = vmatpush1.msra.mxu0 0.0
    %117 = vmatprep.subr.mxu0 0.0
    %118 = vmatpush1.msra.mxu0 0.0
    %119 = vmatprep.mubr.f32.mxu0 0.0
    %120 = vmatmul.mubr.f32.gmra.mrb[0].mxu0 %v53
    %v121 = vpop.f32.mrb[0].mxu0
    %v122 = vadd.f32 %v49, %v121
    %v123 = vpop.f32.mrb[0].mxu0
    %124 = vdwg.mxu0
    %v125 = vmax.f32 %v122, 0.0
    %vm126 = vcmask 162816
    %127 = vst.msk [vmem:[#allocation7] sm:$0xff] %vm126, %v125
    // Predicated region
    $region22: #{tpu_custom_call.1} parent=1 // pred_check
      _
    $region23: #{tpu_custom_call.1} parent=1 // pred_check_branch
      %129 = sbr.rel (0) target = $region25
    $region24: #{tpu_custom_call.1} parent=1 // pred_region
      %s131 = ssub.s32 128, 128
      %132 = vsyncadd [#allocation4], %s131
      %s134 = sshll.u32 [#allocation7], 4
      %s135 = int_to_ptr.vmem [resolvable:$true] %s134
      %137 = dma.vmem_to_hbm [thread:$0]  %s135, 128, %s3, [#allocation4]
    $region25: #{tpu_custom_call.1} parent=1 // pred_fallthru
      _
    // Predicated region
    $region26: #{tpu_custom_call.1} parent=1 // pred_check
      _
    $region27: #{tpu_custom_call.1} parent=1 // pred_check_branch
      %139 = sbr.rel (0) target = $region29
    $region28: #{tpu_custom_call.1} parent=1 // pred_region
      %140 = dma.done [#allocation4], 128
    $region29: #{tpu_custom_call.1} parent=1 // pred_fallthru
      _
    %141 = vsyncpa [#allocation3], 1
    %142 = vsyncpa [#allocation6], 1
    %143 = vsyncpa [#allocation4], 1

</llo_original>
